<compile_context>
chip_gen: v6e
topology: v6e:2x2x1
jax: 0.10.0
libtpu: 0.0.40
codegen_flags: <defaults>
</compile_context>

<pallas_src>
import numpy as np
import jax
import jax.numpy as jnp
from jax.experimental import pallas as pl
from jax.experimental.pallas import tpu as pltpu


# ----------------------------- config (matches the torch module) -------------------
IN_CHANNEL = 4                       # inChanel
VIEW_PE = 6                          # viewpe
FEA_PE = 6                           # feape
FEATURE_C = 128                      # featureC (torch default)
N_DIRECT = IN_CHANNEL + 3            # raw features + viewdirs              = 7
N_PE_F = FEA_PE * IN_CHANNEL         # encoded-feature width (per sin/cos)  = 24
N_PE_V = VIEW_PE * 3                 # encoded-viewdir width (per sin/cos)  = 18
IN_MLPC = N_DIRECT + 2 * (N_PE_F + N_PE_V)   # torch in_mlpC                = 91
OUT_PAD = 8                          # rgb rows padded to 8 for the last matmul
SLAB_K = 128                         # K of the fused layer-1 matmul (zero-padded)

# The in-kernel slab layout assumes feat and view share the frequency count (6 == 6).
assert FEA_PE == VIEW_PE, "kernel slab layout assumes feape == viewpe"


# ----------------------------- slab-row bookkeeping (host-side) --------------------
def _slab_row_map():
    """Map each row of the kernel's layer-1 slab to a torch mlp_in column (-1 = pad).

    Slab layout (rows; 8-aligned pieces; point index on lanes):
      piece 0     : [feat0..3, view0..2, 0]
      piece 1+2k  : sin(2**k * [feat, view, 0])
      piece 2+2k  : cos(2**k * [feat, view, 0])          for k = 0..FEA_PE-1
    torch mlp_in layout: [feat(4), view(3), sinF(24), cosF(24), sinV(18), cosV(18)]
    with channel-major PE columns (index = c*freqs + k).
    """
    rows = list(range(N_DIRECT)) + [-1]
    for k in range(FEA_PE):
        sin_rows = [N_DIRECT + c * FEA_PE + k for c in range(IN_CHANNEL)]
        sin_rows += [N_DIRECT + 2 * N_PE_F + c * VIEW_PE + k for c in range(3)]
        cos_rows = [N_DIRECT + N_PE_F + c * FEA_PE + k for c in range(IN_CHANNEL)]
        cos_rows += [N_DIRECT + 2 * N_PE_F + N_PE_V + c * VIEW_PE + k for c in range(3)]
        rows += sin_rows + [-1] + cos_rows + [-1]
    return np.asarray(rows, np.int32)


_SLAB_ROWS = _slab_row_map()                              # (104,)
_SLAB_IDX = np.maximum(_SLAB_ROWS, 0)
_SLAB_MASK = (_SLAB_ROWS >= 0).astype(np.float32)[:, None]


def _prepare_kernel_params(params):
    """Permute / transpose / zero-pad the torch-style (W stored [in,out]) params."""
    w1, b1, w2, b2, w3, b3 = params
    c_h = w1.shape[1]
    w1_rows = w1[_SLAB_IDX] * _SLAB_MASK                                   # (104, C)
    w1_rows = jnp.pad(w1_rows, ((0, SLAB_K - w1_rows.shape[0]), (0, 0)))   # (128, C)
    w1t = w1_rows.T.astype(jnp.bfloat16)                                   # (C, 128)
    w2t = w2.T.astype(jnp.bfloat16)                                        # (C, C)
    w3t = jnp.pad(w3.T, ((0, OUT_PAD - w3.shape[1]), (0, 0))).astype(jnp.bfloat16)  # (8, C)
    return (w1t, jnp.reshape(b1, (c_h, 1)),
            w2t, jnp.reshape(b2, (c_h, 1)),
            w3t, jnp.reshape(b3, (3, 1)))


# ----------------------------- Pallas kernel ----------------------------------------
def _mlp_kernel(base_ref, w1_ref, b1_ref, w2_ref, b2_ref, w3_ref, b3_ref, o_ref):
    f32, bf16 = jnp.float32, jnp.bfloat16
    x0 = base_ref[...]                              # (8, tm): feat(4), view(3), zero row
    tm = x0.shape[1]

    # Fused positional encoding (lane-dense, point axis on lanes): real sin/cos only at
    # the base frequency, higher frequencies via sin(2x)=2sc, cos(2x)=1-2s^2.
    s = jnp.sin(x0)
    c = jnp.cos(x0)
    pieces = [x0, s, c]
    for _ in range(FEA_PE - 1):
        s, c = 2.0 * s * c, 1.0 - 2.0 * s * s       # tuple RHS uses previous (s, c)
        pieces += [s, c]
    pad_rows = SLAB_K - 8 * len(pieces)             # 128 - 104 = 24 zero rows
    pieces.append(jnp.zeros((pad_rows, tm), f32))
    slab = jnp.concatenate(pieces, axis=0).astype(bf16)          # (128, tm), 8-aligned

    # 3-layer MLP, transposed: (C, K) @ (K, tm) keeps points on the 128-lane axis.
    h = jnp.dot(w1_ref[...], slab, preferred_element_type=f32) + b1_ref[...]
    h = jnp.maximum(h, 0.0).astype(bf16)                         # (C, tm)
    h = jnp.dot(w2_ref[...], h, preferred_element_type=f32) + b2_ref[...]
    h = jnp.maximum(h, 0.0).astype(bf16)                         # (C, tm)
    y = jnp.dot(w3_ref[...], h, preferred_element_type=f32)      # (8, tm), rows 3..7 dead
    z = y[0:3, :] + b3_ref[...]                                  # (3, tm)
    o_ref[...] = 1.0 / (1.0 + jnp.exp(-z))                       # exact sigmoid


# ----------------------------- wrapper / pallas_call ---------------------------------
def _round_up(x, m):
    return (x + m - 1) // m * m


def _pick_tm(n_rows, tm_max):
    # Lane-dense tiles want tm % 128 == 0.  Target >= 4 grid steps when the batch allows
    # (>= 2 steps per TensorCore on v7x => DMA/compute overlap on both cores); cap at
    # tm_max=1024 so f32 intermediates stay well inside v5e's 16 MiB scoped-VMEM default.
    tm = _round_up(max(1, (n_rows + 3) // 4), 128)
    return int(max(128, min(tm_max, tm)))


def mlp_render_fea_pallas(features, viewdirs, kparams, *, tm_max=1024):
    """features: [N, 4] f32, viewdirs: [N, 3] f32.  Returns rgb channel-major, [3, N]."""
    n = features.shape[0]
    c_h = kparams[2].shape[0]                       # W2^T is (C, C)
    tm = _pick_tm(n, tm_max)
    n_pad = _round_up(n, tm)

    # Lane-dense kernel input: one (8, N_pad) slab = [feat(4); view(3); zero row].
    base = jnp.concatenate([features, viewdirs], axis=-1)             # (n, 7)
    base = jnp.pad(base, ((0, n_pad - n), (0, 8 - N_DIRECT)))         # (n_pad, 8)
    base_t = base.T                                                    # (8, n_pad)

    row = lambda i: (0, i)      # activations: tiled along the point/lane axis
    const = lambda i: (0, 0)    # weights/biases: same block each step -> stay resident

    cost = pl.CostEstimate(
        flops=int(2 * n_pad * c_h * (SLAB_K + c_h + OUT_PAD)),
        transcendentals=int(n_pad * (2 * 8 + 3)),
        bytes_accessed=int(4 * n_pad * (8 + 3)
                           + 2 * c_h * (SLAB_K + c_h + OUT_PAD)
                           + 4 * (2 * c_h + 3)),
    )

    out_t = pl.pallas_call(
        _mlp_kernel,
        out_shape=jax.ShapeDtypeStruct((3, n_pad), jnp.float32),
        grid_spec=pltpu.PrefetchScalarGridSpec(
            num_scalar_prefetch=0,
            grid=(n_pad // tm,),
            in_specs=[
                pl.BlockSpec((8, tm), row),             # base^T tile (feat+view), lane-dense
                pl.BlockSpec((c_h, SLAB_K), const),     # W1^T (row-permuted, zero-padded) bf16
                pl.BlockSpec((c_h, 1), const),          # b1 column
                pl.BlockSpec((c_h, c_h), const),        # W2^T bf16
                pl.BlockSpec((c_h, 1), const),          # b2 column
                pl.BlockSpec((OUT_PAD, c_h), const),    # W3^T (padded to 8 rows) bf16
                pl.BlockSpec((3, 1), const),            # b3 column
            ],
            out_specs=pl.BlockSpec((3, tm), row),       # rgb^T, lane-dense stores
        ),
        compiler_params=pltpu.CompilerParams(
            dimension_semantics=("parallel",)),
        cost_estimate=cost,
    )(base_t, *kparams)
    return out_t[:, :n]                                 # (3, N)


def mlp_render_fea_forward(pts, viewdirs, features, params, *, tm_max=1024):
    # `pts` is accepted and ignored, exactly like the torch module's forward.
    del pts
    kparams = _prepare_kernel_params(params)
    rgb_t = mlp_render_fea_pallas(features, viewdirs, kparams, tm_max=tm_max)
    # Consumers that can take channel-major rgb should use rgb_t directly (saves this
    # skinny XLA transpose); the torch forward contract is (N, 3).
    return rgb_t.T


# ----------------------------- pure-JAX reference (torch semantics) -------------------
def positional_encoding(positions, freqs):
    freq_bands = (2.0 ** jnp.arange(freqs)).astype(jnp.float32)
    pts = (positions[..., None] * freq_bands).reshape(
        positions.shape[:-1] + (freqs * positions.shape[-1],))
    return jnp.concatenate([jnp.sin(pts), jnp.cos(pts)], axis=-1)


def mlp_render_fea_reference(pts, viewdirs, features, params):
    del pts
    w1, b1, w2, b2, w3, b3 = params
    mlp_in = jnp.concatenate(
        [features, viewdirs,
         positional_encoding(features, FEA_PE),
         positional_encoding(viewdirs, VIEW_PE)], axis=-1)
    h = jnp.maximum(mlp_in @ w1 + b1, 0.0)
    h = jnp.maximum(h @ w2 + b2, 0.0)
    return jax.nn.sigmoid(h @ w3 + b3)


# ----------------------------- deterministic params -----------------------------------
def init_params(key):
    k1, k2, k3 = jax.random.split(key, 3)

    def linear(k, fan_in, fan_out, zero_bias=False):
        # torch.nn.Linear default init: U(-1/sqrt(fan_in), 1/sqrt(fan_in));
        # weights kept [in, out] so the reference computes x @ W.
        bound = 1.0 / float(np.sqrt(fan_in))
        kw, kb = jax.random.split(k)
        w = jax.random.uniform(kw, (fan_in, fan_out), jnp.float32, -bound, bound)
        b = (jnp.zeros((1, fan_out), jnp.float32) if zero_bias else
             jax.random.uniform(kb, (1, fan_out), jnp.float32, -bound, bound))
        return w, b

    w1, b1 = linear(k1, IN_MLPC, FEATURE_C)
    w2, b2 = linear(k2, FEATURE_C, FEATURE_C)
    w3, b3 = linear(k3, FEATURE_C, 3, zero_bias=True)        # constant_(bias, 0)
    return (w1, b1, w2, b2, w3, b3)


if __name__ == "__main__":
    key = jax.random.PRNGKey(0)
    kp_, kv_, kf_, kw_ = jax.random.split(key, 4)

    N = 512  # small point batch: tm=128 -> 4 grid steps (2 per TensorCore on v7x)
    pts = jax.random.normal(kp_, (N, 3), jnp.float32)        # unused (as in torch)
    viewdirs = jax.random.normal(kv_, (N, 3), jnp.float32)
    features = jax.random.normal(kf_, (N, IN_CHANNEL), jnp.float32)
    params = init_params(kw_)

    fwd = jax.jit(mlp_render_fea_forward)
    rgb = jax.block_until_ready(fwd(pts, viewdirs, features, params))
    assert rgb.shape == (N, 3) and rgb.dtype == jnp.float32

    ref = jax.block_until_ready(
        jax.jit(mlp_render_fea_reference)(pts, viewdirs, features, params))
    assert float(jnp.max(jnp.abs(rgb - ref))) < 5e-2, "kernel mismatch vs reference"

    print("KERNEL_OK")
</pallas_src>

<mosaic_0001>
module attributes {stable_mosaic.version = 11 : i64} {
  func.func @_mlp_kernel(%arg0: i32, %arg1: memref<8x128xf32, #tpu.memory_space<vmem>>, %arg2: memref<128x128xbf16, #tpu.memory_space<vmem>>, %arg3: memref<128x1xf32, #tpu.memory_space<vmem>>, %arg4: memref<128x128xbf16, #tpu.memory_space<vmem>>, %arg5: memref<128x1xf32, #tpu.memory_space<vmem>>, %arg6: memref<8x128xbf16, #tpu.memory_space<vmem>>, %arg7: memref<3x1xf32, #tpu.memory_space<vmem>>, %arg8: memref<3x128xf32, #tpu.memory_space<vmem>>) attributes {dimension_semantics = [#tpu.dimension_semantics<parallel>], iteration_bounds = array<i64: 4>, scalar_prefetch = 0 : i64, scratch_operands = 0 : i64, tpu.core_type = #tpu.core_type<tc>, window_params = [{transform_indices = @transform_0, window_bounds = array<i64: 8, 128>}, {pipeline_mode = #tpu.pipeline_mode<synchronous>, transform_indices = @transform_1, window_bounds = array<i64: 128, 128>}, {pipeline_mode = #tpu.pipeline_mode<synchronous>, transform_indices = @transform_2, window_bounds = array<i64: 128, 1>}, {pipeline_mode = #tpu.pipeline_mode<synchronous>, transform_indices = @transform_3, window_bounds = array<i64: 128, 128>}, {pipeline_mode = #tpu.pipeline_mode<synchronous>, transform_indices = @transform_4, window_bounds = array<i64: 128, 1>}, {pipeline_mode = #tpu.pipeline_mode<synchronous>, transform_indices = @transform_5, window_bounds = array<i64: 8, 128>}, {pipeline_mode = #tpu.pipeline_mode<synchronous>, transform_indices = @transform_6, window_bounds = array<i64: 3, 1>}, {transform_indices = @transform_7, window_bounds = array<i64: 3, 128>}]} {
    %c0 = arith.constant 0 : index
    %c0_0 = arith.constant 0 : index
    %0 = vector.load %arg1[%c0, %c0_0] : memref<8x128xf32, #tpu.memory_space<vmem>>, vector<8x128xf32>
    %1 = math.sin %0 : vector<8x128xf32>
    %2 = math.cos %0 : vector<8x128xf32>
    %cst = arith.constant 2.000000e+00 : f32
    %3 = vector.broadcast %cst : f32 to vector<8x128xf32>
    %4 = arith.mulf %3, %1 : vector<8x128xf32>
    %5 = arith.mulf %4, %2 : vector<8x128xf32>
    %cst_1 = arith.constant 2.000000e+00 : f32
    %6 = vector.broadcast %cst_1 : f32 to vector<8x128xf32>
    %7 = arith.mulf %6, %1 : vector<8x128xf32>
    %8 = arith.mulf %7, %1 : vector<8x128xf32>
    %cst_2 = arith.constant 1.000000e+00 : f32
    %9 = vector.broadcast %cst_2 : f32 to vector<8x128xf32>
    %10 = arith.subf %9, %8 : vector<8x128xf32>
    %cst_3 = arith.constant 2.000000e+00 : f32
    %11 = vector.broadcast %cst_3 : f32 to vector<8x128xf32>
    %12 = arith.mulf %11, %5 : vector<8x128xf32>
    %13 = arith.mulf %12, %10 : vector<8x128xf32>
    %cst_4 = arith.constant 2.000000e+00 : f32
    %14 = vector.broadcast %cst_4 : f32 to vector<8x128xf32>
    %15 = arith.mulf %14, %5 : vector<8x128xf32>
    %16 = arith.mulf %15, %5 : vector<8x128xf32>
    %cst_5 = arith.constant 1.000000e+00 : f32
    %17 = vector.broadcast %cst_5 : f32 to vector<8x128xf32>
    %18 = arith.subf %17, %16 : vector<8x128xf32>
    %cst_6 = arith.constant 2.000000e+00 : f32
    %19 = vector.broadcast %cst_6 : f32 to vector<8x128xf32>
    %20 = arith.mulf %19, %13 : vector<8x128xf32>
    %21 = arith.mulf %20, %18 : vector<8x128xf32>
    %cst_7 = arith.constant 2.000000e+00 : f32
    %22 = vector.broadcast %cst_7 : f32 to vector<8x128xf32>
    %23 = arith.mulf %22, %13 : vector<8x128xf32>
    %24 = arith.mulf %23, %13 : vector<8x128xf32>
    %cst_8 = arith.constant 1.000000e+00 : f32
    %25 = vector.broadcast %cst_8 : f32 to vector<8x128xf32>
    %26 = arith.subf %25, %24 : vector<8x128xf32>
    %cst_9 = arith.constant 2.000000e+00 : f32
    %27 = vector.broadcast %cst_9 : f32 to vector<8x128xf32>
    %28 = arith.mulf %27, %21 : vector<8x128xf32>
    %29 = arith.mulf %28, %26 : vector<8x128xf32>
    %cst_10 = arith.constant 2.000000e+00 : f32
    %30 = vector.broadcast %cst_10 : f32 to vector<8x128xf32>
    %31 = arith.mulf %30, %21 : vector<8x128xf32>
    %32 = arith.mulf %31, %21 : vector<8x128xf32>
    %cst_11 = arith.constant 1.000000e+00 : f32
    %33 = vector.broadcast %cst_11 : f32 to vector<8x128xf32>
    %34 = arith.subf %33, %32 : vector<8x128xf32>
    %cst_12 = arith.constant 2.000000e+00 : f32
    %35 = vector.broadcast %cst_12 : f32 to vector<8x128xf32>
    %36 = arith.mulf %35, %29 : vector<8x128xf32>
    %37 = arith.mulf %36, %34 : vector<8x128xf32>
    %cst_13 = arith.constant 2.000000e+00 : f32
    %38 = vector.broadcast %cst_13 : f32 to vector<8x128xf32>
    %39 = arith.mulf %38, %29 : vector<8x128xf32>
    %40 = arith.mulf %39, %29 : vector<8x128xf32>
    %cst_14 = arith.constant 1.000000e+00 : f32
    %41 = vector.broadcast %cst_14 : f32 to vector<8x128xf32>
    %42 = arith.subf %41, %40 : vector<8x128xf32>
    %cst_15 = arith.constant 0.000000e+00 : f32
    %43 = vector.broadcast %cst_15 : f32 to vector<24x128xf32>
    %44 = tpu.concatenate %0, %1, %2, %5, %10, %13, %18, %21, %26, %29, %34, %37, %42, %43 in 0 : vector<8x128xf32>, vector<8x128xf32>, vector<8x128xf32>, vector<8x128xf32>, vector<8x128xf32>, vector<8x128xf32>, vector<8x128xf32>, vector<8x128xf32>, vector<8x128xf32>, vector<8x128xf32>, vector<8x128xf32>, vector<8x128xf32>, vector<8x128xf32>, vector<24x128xf32> -> vector<128x128xf32>
    %45 = arith.truncf %44 : vector<128x128xf32> to vector<128x128xbf16>
    %c0_16 = arith.constant 0 : index
    %c0_17 = arith.constant 0 : index
    %46 = vector.load %arg2[%c0_16, %c0_17] : memref<128x128xbf16, #tpu.memory_space<vmem>>, vector<128x128xbf16>
    %cst_18 = arith.constant dense<0.000000e+00> : vector<128x128xf32>
    %47 = tpu.matmul %46, %45, %cst_18 {dimension_numbers = #tpu.dot_dimension_numbers<[1], [0], [0], [1], [0, 0, 1, 1], [], []>} : vector<128x128xbf16>, vector<128x128xbf16>, vector<128x128xf32> -> vector<128x128xf32>
    %c0_19 = arith.constant 0 : index
    %c0_20 = arith.constant 0 : index
    %48 = vector.load %arg3[%c0_19, %c0_20] : memref<128x1xf32, #tpu.memory_space<vmem>>, vector<128x1xf32>
    %49 = vector.broadcast %48 : vector<128x1xf32> to vector<128x128xf32>
    %50 = arith.addf %47, %49 : vector<128x128xf32>
    %cst_21 = arith.constant 0.000000e+00 : f32
    %51 = vector.broadcast %cst_21 : f32 to vector<128x128xf32>
    %52 = arith.maximumf %50, %51 : vector<128x128xf32>
    %53 = arith.truncf %52 : vector<128x128xf32> to vector<128x128xbf16>
    %c0_22 = arith.constant 0 : index
    %c0_23 = arith.constant 0 : index
    %54 = vector.load %arg4[%c0_22, %c0_23] : memref<128x128xbf16, #tpu.memory_space<vmem>>, vector<128x128xbf16>
    %cst_24 = arith.constant dense<0.000000e+00> : vector<128x128xf32>
    %55 = tpu.matmul %54, %53, %cst_24 {dimension_numbers = #tpu.dot_dimension_numbers<[1], [0], [0], [1], [0, 0, 1, 1], [], []>} : vector<128x128xbf16>, vector<128x128xbf16>, vector<128x128xf32> -> vector<128x128xf32>
    %c0_25 = arith.constant 0 : index
    %c0_26 = arith.constant 0 : index
    %56 = vector.load %arg5[%c0_25, %c0_26] : memref<128x1xf32, #tpu.memory_space<vmem>>, vector<128x1xf32>
    %57 = vector.broadcast %56 : vector<128x1xf32> to vector<128x128xf32>
    %58 = arith.addf %55, %57 : vector<128x128xf32>
    %cst_27 = arith.constant 0.000000e+00 : f32
    %59 = vector.broadcast %cst_27 : f32 to vector<128x128xf32>
    %60 = arith.maximumf %58, %59 : vector<128x128xf32>
    %61 = arith.truncf %60 : vector<128x128xf32> to vector<128x128xbf16>
    %c0_28 = arith.constant 0 : index
    %c0_29 = arith.constant 0 : index
    %62 = vector.load %arg6[%c0_28, %c0_29] : memref<8x128xbf16, #tpu.memory_space<vmem>>, vector<8x128xbf16>
    %cst_30 = arith.constant dense<0.000000e+00> : vector<8x128xf32>
    %63 = tpu.matmul %62, %61, %cst_30 {dimension_numbers = #tpu.dot_dimension_numbers<[1], [0], [0], [1], [0, 0, 1, 1], [], []>} : vector<8x128xbf16>, vector<128x128xbf16>, vector<8x128xf32> -> vector<8x128xf32>
    %64 = vector.extract_strided_slice %63 {offsets = [0, 0], sizes = [3, 128], strides = [1, 1]} : vector<8x128xf32> to vector<3x128xf32>
    %c0_31 = arith.constant 0 : index
    %c0_32 = arith.constant 0 : index
    %65 = vector.load %arg7[%c0_31, %c0_32] : memref<3x1xf32, #tpu.memory_space<vmem>>, vector<3x1xf32>
    %66 = vector.broadcast %65 : vector<3x1xf32> to vector<3x128xf32>
    %67 = arith.addf %64, %66 : vector<3x128xf32>
    %cst_33 = arith.constant 0.000000e+00 : f32
    %68 = vector.broadcast %cst_33 : f32 to vector<3x128xf32>
    %69 = arith.subf %68, %67 : vector<3x128xf32>
    %70 = math.exp %69 : vector<3x128xf32>
    %cst_34 = arith.constant 1.000000e+00 : f32
    %71 = vector.broadcast %cst_34 : f32 to vector<3x128xf32>
    %72 = arith.addf %71, %70 : vector<3x128xf32>
    %cst_35 = arith.constant 1.000000e+00 : f32
    %73 = vector.broadcast %cst_35 : f32 to vector<3x128xf32>
    %74 = arith.divf %73, %72 : vector<3x128xf32>
    %c0_36 = arith.constant 0 : index
    %c0_37 = arith.constant 0 : index
    %75 = vector.load %arg8[%c0_36, %c0_37] : memref<3x128xf32, #tpu.memory_space<vmem>>, vector<3x128xf32>
    tpu.vector_store %arg8[%c0_36, %c0_37], %74 {strides = array<i32>} : memref<3x128xf32, #tpu.memory_space<vmem>>, vector<3x128xf32>,
    return
  }
  func.func @transform_0(%arg0: i32) -> (i32, i32) {
    %c0_i32 = arith.constant 0 : i32
    %c0_i32_0 = arith.constant 0 : i32
    return %c0_i32, %arg0 : i32, i32
  }
  func.func @transform_1(%arg0: i32) -> (i32, i32) {
    %c0_i32 = arith.constant 0 : i32
    %c0_i32_0 = arith.constant 0 : i32
    %c0_i32_1 = arith.constant 0 : i32
    return %c0_i32, %c0_i32_0 : i32, i32
  }
  func.func @transform_2(%arg0: i32) -> (i32, i32) {
    %c0_i32 = arith.constant 0 : i32
    %c0_i32_0 = arith.constant 0 : i32
    %c0_i32_1 = arith.constant 0 : i32
    return %c0_i32, %c0_i32_0 : i32, i32
  }
  func.func @transform_3(%arg0: i32) -> (i32, i32) {
    %c0_i32 = arith.constant 0 : i32
    %c0_i32_0 = arith.constant 0 : i32
    %c0_i32_1 = arith.constant 0 : i32
    return %c0_i32, %c0_i32_0 : i32, i32
  }
  func.func @transform_4(%arg0: i32) -> (i32, i32) {
    %c0_i32 = arith.constant 0 : i32
    %c0_i32_0 = arith.constant 0 : i32
    %c0_i32_1 = arith.constant 0 : i32
    return %c0_i32, %c0_i32_0 : i32, i32
  }
  func.func @transform_5(%arg0: i32) -> (i32, i32) {
    %c0_i32 = arith.constant 0 : i32
    %c0_i32_0 = arith.constant 0 : i32
    %c0_i32_1 = arith.constant 0 : i32
    return %c0_i32, %c0_i32_0 : i32, i32
  }
  func.func @transform_6(%arg0: i32) -> (i32, i32) {
    %c0_i32 = arith.constant 0 : i32
    %c0_i32_0 = arith.constant 0 : i32
    %c0_i32_1 = arith.constant 0 : i32
    return %c0_i32, %c0_i32_0 : i32, i32
  }
  func.func @transform_7(%arg0: i32) -> (i32, i32) {
    %c0_i32 = arith.constant 0 : i32
    %c0_i32_0 = arith.constant 0 : i32
    return %c0_i32, %arg0 : i32, i32
  }
}

</mosaic_0001>

<llo_original>
// kernel: mlp_render_fea_forward.1
$region0: #{mlp_render_fea_forward.1}
  #allocation0 [shape = 'u32[]', space=smem, size = 0x4, offset = 0x4, fixed_abs, tag = 'smem constant byte address 0x4 - core index']
  #allocation1 [shape = 'u32[144,128]{1,0:T(1,128)}', space=vmem, size = 0x12000, scoped, tag = 'internal scratch']
  %s0 = inlined_call_operand.vmem [shape: f32[8,512], index: 0, kind: input, shape index: {}]
  %s1 = inlined_call_operand.vmem [shape: bf16[128,128], index: 1, kind: input, shape index: {}]
  %s2 = inlined_call_operand.vmem [shape: f32[128,1], index: 2, kind: input, shape index: {}]
  %s3 = inlined_call_operand.vmem [shape: bf16[128,128], index: 3, kind: input, shape index: {}]
  %s4 = inlined_call_operand.vmem [shape: f32[128,1], index: 4, kind: input, shape index: {}]
  %s5 = inlined_call_operand.vmem [shape: bf16[8,128], index: 5, kind: input, shape index: {}]
  %s6 = inlined_call_operand.vmem [shape: f32[3,1], index: 6, kind: input, shape index: {}]
  %s7 = inlined_call_operand.hbm [shape: f32[3,512], index: 7, kind: output, shape index: {}]
  %s8 = sld [smem:[#allocation0]]
  $region61: #{mlp_render_fea_forward.1} parent=0
    _
  %s10 = ssub.s32 1, %s8
  %s11 = scalar_select 0, %s10, %s8
  $region1: #{mlp_render_fea_forward.1} parent=0
    #allocation2 [shape = 'u8[4096]{0}', space=vmem, size = 0x1000, scoped, tag = 'output window, operand 0']
    #allocation3 [shape = 's32[2]{0}', space=sflag, size = 0x8, scoped, tag = 'scoped memory for mlp_render_fea_forward.1']
    %12 = vsyncpa [#allocation3], 0
    %s13 = scalar_lea.sflag [#allocation3], 1
    %14 = vsyncpa %s13, 0
    loop: start=0, step=1, limit=6
    $region2: #{mlp_render_fea_forward.1} parent=1 // loop_pre_header
      _
    $region3: #{mlp_render_fea_forward.1} parent=1 // loop_header
      %s16 = sphi 0, %s20
      %p17 = scmp.ge.s32.totalorder %s16, 6
      %s26 = sphi 0, %s28
      %s29 = sphi 0, %s26
      %s30 = sphi 0, %s29
      %s46 = sphi 0, %s30
      %s50 = sphi 0, %s50
      %s52 = sphi 0, %s50
      %s53 = sphi 0, %s52
      %s67 = sphi 0, %s53
      %s71 = sphi 0, %s71
      %s73 = sphi 0, %s71
      %s74 = sphi 0, %s73
      %s88 = sphi 0, %s74
      %s92 = sphi 0, %s92
      %s94 = sphi 0, %s92
      %s95 = sphi 0, %s94
      %s109 = sphi 0, %s95
      %s113 = sphi 0, %s113
      %s115 = sphi 0, %s113
      %s116 = sphi 0, %s115
      %s130 = sphi 0, %s116
      %s134 = sphi 0, %s134
      %s136 = sphi 0, %s134
      %s137 = sphi 0, %s136
      %s151 = sphi 0, %s137
      %s155 = sphi 0, %s155
      %s157 = sphi 0, %s155
      %s158 = sphi 0, %s157
      %s172 = sphi 0, %s158
      %s178 = sphi 0, %s180
      %s181 = sphi 0, %s178
      %s182 = sphi 0, %s181
      %s198 = sphi 0, %s182
    $region4: #{mlp_render_fea_forward.1} parent=1 // loop_header_branch
      %19 = sbr.rel (%p17) target = $region8
    $region5: #{mlp_render_fea_forward.1} parent=1 // loop_body
      %s21 = ssub.s32 %s16, 1
      %s22 = ssub.s32 %s16, 2
      %s23 = sadd.s32 %s16, 1
      %s24 = ssub.s32 %s16, %s23
      %p25 = scmp.eq.s32.totalorder %s24, 0
      %s27 = sadd.s32 %s26, 1
      %s28 = scalar_select %p25, %s26, %s27
      %p31 = pneg %p25
      %p32 = scmp.eq.s32.totalorder %s16, 3
      %p33 = por %p31, %p32
      %p34 = scmp.ne.s32.totalorder %s26, %s29
      %p35 = scmp.eq.s32.totalorder %s16, 0
      %p36 = por %p34, %p35
      %p37 = scmp.ne.s32.totalorder %s26, %s29
      %p38 = scmp.eq.s32.totalorder %s21, 3
      %p39 = por %p37, %p38
      %p40 = scmp.ne.s32.totalorder %s29, %s30
      %p41 = scmp.eq.s32.totalorder %s21, 0
      %p42 = por %p40, %p41
      %p43 = scmp.ne.s32.totalorder %s29, %s30
      %p44 = scmp.eq.s32.totalorder %s22, 3
      %p45 = por %p43, %p44
      %p47 = scmp.ne.s32.totalorder %s30, %s46
      %p48 = scmp.eq.s32.totalorder %s22, 0
      %p49 = por %p47, %p48
      %s51 = sadd.s32 %s50, 1
      %p54 = scmp.eq.s32.totalorder %s16, 3
      %p55 = scmp.ne.s32.totalorder %s50, %s52
      %p56 = scmp.eq.s32.totalorder %s16, 0
      %p57 = por %p55, %p56
      %p58 = scmp.ne.s32.totalorder %s50, %s52
      %p59 = scmp.eq.s32.totalorder %s21, 3
      %p60 = por %p58, %p59
      %p61 = scmp.ne.s32.totalorder %s52, %s53
      %p62 = scmp.eq.s32.totalorder %s21, 0
      %p63 = por %p61, %p62
      %p64 = scmp.ne.s32.totalorder %s52, %s53
      %p65 = scmp.eq.s32.totalorder %s22, 3
      %p66 = por %p64, %p65
      %p68 = scmp.ne.s32.totalorder %s53, %s67
      %p69 = scmp.eq.s32.totalorder %s22, 0
      %p70 = por %p68, %p69
      %s72 = sadd.s32 %s71, 1
      %p75 = scmp.eq.s32.totalorder %s16, 3
      %p76 = scmp.ne.s32.totalorder %s71, %s73
      %p77 = scmp.eq.s32.totalorder %s16, 0
      %p78 = por %p76, %p77
      %p79 = scmp.ne.s32.totalorder %s71, %s73
      %p80 = scmp.eq.s32.totalorder %s21, 3
      %p81 = por %p79, %p80
      %p82 = scmp.ne.s32.totalorder %s73, %s74
      %p83 = scmp.eq.s32.totalorder %s21, 0
      %p84 = por %p82, %p83
      %p85 = scmp.ne.s32.totalorder %s73, %s74
      %p86 = scmp.eq.s32.totalorder %s22, 3
      %p87 = por %p85, %p86
      %p89 = scmp.ne.s32.totalorder %s74, %s88
      %p90 = scmp.eq.s32.totalorder %s22, 0
      %p91 = por %p89, %p90
      %s93 = sadd.s32 %s92, 1
      %p96 = scmp.eq.s32.totalorder %s16, 3
      %p97 = scmp.ne.s32.totalorder %s92, %s94
      %p98 = scmp.eq.s32.totalorder %s16, 0
      %p99 = por %p97, %p98
      %p100 = scmp.ne.s32.totalorder %s92, %s94
      %p101 = scmp.eq.s32.totalorder %s21, 3
      %p102 = por %p100, %p101
      %p103 = scmp.ne.s32.totalorder %s94, %s95
      %p104 = scmp.eq.s32.totalorder %s21, 0
      %p105 = por %p103, %p104
      %p106 = scmp.ne.s32.totalorder %s94, %s95
      %p107 = scmp.eq.s32.totalorder %s22, 3
      %p108 = por %p106, %p107
      %p110 = scmp.ne.s32.totalorder %s95, %s109
      %p111 = scmp.eq.s32.totalorder %s22, 0
      %p112 = por %p110, %p111
      %s114 = sadd.s32 %s113, 1
      %p117 = scmp.eq.s32.totalorder %s16, 3
      %p118 = scmp.ne.s32.totalorder %s113, %s115
      %p119 = scmp.eq.s32.totalorder %s16, 0
      %p120 = por %p118, %p119
      %p121 = scmp.ne.s32.totalorder %s113, %s115
      %p122 = scmp.eq.s32.totalorder %s21, 3
      %p123 = por %p121, %p122
      %p124 = scmp.ne.s32.totalorder %s115, %s116
      %p125 = scmp.eq.s32.totalorder %s21, 0
      %p126 = por %p124, %p125
      %p127 = scmp.ne.s32.totalorder %s115, %s116
      %p128 = scmp.eq.s32.totalorder %s22, 3
      %p129 = por %p127, %p128
      %p131 = scmp.ne.s32.totalorder %s116, %s130
      %p132 = scmp.eq.s32.totalorder %s22, 0
      %p133 = por %p131, %p132
      %s135 = sadd.s32 %s134, 1
      %p138 = scmp.eq.s32.totalorder %s16, 3
      %p139 = scmp.ne.s32.totalorder %s134, %s136
      %p140 = scmp.eq.s32.totalorder %s16, 0
      %p141 = por %p139, %p140
      %p142 = scmp.ne.s32.totalorder %s134, %s136
      %p143 = scmp.eq.s32.totalorder %s21, 3
      %p144 = por %p142, %p143
      %p145 = scmp.ne.s32.totalorder %s136, %s137
      %p146 = scmp.eq.s32.totalorder %s21, 0
      %p147 = por %p145, %p146
      %p148 = scmp.ne.s32.totalorder %s136, %s137
      %p149 = scmp.eq.s32.totalorder %s22, 3
      %p150 = por %p148, %p149
      %p152 = scmp.ne.s32.totalorder %s137, %s151
      %p153 = scmp.eq.s32.totalorder %s22, 0
      %p154 = por %p152, %p153
      %s156 = sadd.s32 %s155, 1
      %p159 = scmp.eq.s32.totalorder %s16, 3
      %p160 = scmp.ne.s32.totalorder %s155, %s157
      %p161 = scmp.eq.s32.totalorder %s16, 0
      %p162 = por %p160, %p161
      %p163 = scmp.ne.s32.totalorder %s155, %s157
      %p164 = scmp.eq.s32.totalorder %s21, 3
      %p165 = por %p163, %p164
      %p166 = scmp.ne.s32.totalorder %s157, %s158
      %p167 = scmp.eq.s32.totalorder %s21, 0
      %p168 = por %p166, %p167
      %p169 = scmp.ne.s32.totalorder %s157, %s158
      %p170 = scmp.eq.s32.totalorder %s22, 3
      %p171 = por %p169, %p170
      %p173 = scmp.ne.s32.totalorder %s158, %s172
      %p174 = scmp.eq.s32.totalorder %s22, 0
      %p175 = por %p173, %p174
      %s176 = ssub.s32 %s16, %s23
      %p177 = scmp.eq.s32.totalorder %s176, 0
      %s179 = sadd.s32 %s178, 1
      %s180 = scalar_select %p177, %s178, %s179
      %p183 = pneg %p177
      %p184 = scmp.eq.s32.totalorder %s16, 3
      %p185 = por %p183, %p184
      %p186 = scmp.ne.s32.totalorder %s178, %s181
      %p187 = scmp.eq.s32.totalorder %s16, 0
      %p188 = por %p186, %p187
      %p189 = scmp.ne.s32.totalorder %s178, %s181
      %p190 = scmp.eq.s32.totalorder %s21, 3
      %p191 = por %p189, %p190
      %p192 = scmp.ne.s32.totalorder %s181, %s182
      %p193 = scmp.eq.s32.totalorder %s21, 0
      %p194 = por %p192, %p193
      %p195 = scmp.ne.s32.totalorder %s181, %s182
      %p196 = scmp.eq.s32.totalorder %s22, 3
      %p197 = por %p195, %p196
      %p199 = scmp.ne.s32.totalorder %s182, %s198
      %p200 = scmp.eq.s32.totalorder %s22, 0
      %p201 = por %p199, %p200
      %p202 = scmp.le.s32.totalorder 1, %s16
      %p203 = scmp.lt.s32.totalorder %s16, 5
      %p204 = pnand %p202, %p203
      %p205 = pneg %p204
      // Predicated region
      $region9: #{mlp_render_fea_forward.1} parent=5 // pred_check
        _
      $region10: #{mlp_render_fea_forward.1} parent=5 // pred_check_branch
        %207 = sbr.rel (%p204) target = $region12
      $region11: #{mlp_render_fea_forward.1} parent=5 // pred_region
        %s208 = ssub.s32 %s16, 1
        // Predicated region
        $region13: #{mlp_render_fea_forward.1} parent=11 // pred_check
          %p209 = pneg %p63
        $region14: #{mlp_render_fea_forward.1} parent=11 // pred_check_branch
          %211 = sbr.rel (%p209) target = $region16
        $region15: #{mlp_render_fea_forward.1} parent=11 // pred_region
          _
        $region16: #{mlp_render_fea_forward.1} parent=11 // pred_fallthru
          _
        // Predicated region
        $region17: #{mlp_render_fea_forward.1} parent=11 // pred_check
          %p212 = pneg %p84
        $region18: #{mlp_render_fea_forward.1} parent=11 // pred_check_branch
          %214 = sbr.rel (%p212) target = $region20
        $region19: #{mlp_render_fea_forward.1} parent=11 // pred_region
          _
        $region20: #{mlp_render_fea_forward.1} parent=11 // pred_fallthru
          _
        // Predicated region
        $region21: #{mlp_render_fea_forward.1} parent=11 // pred_check
          %p215 = pneg %p105
        $region22: #{mlp_render_fea_forward.1} parent=11 // pred_check_branch
          %217 = sbr.rel (%p215) target = $region24
        $region23: #{mlp_render_fea_forward.1} parent=11 // pred_region
          _
        $region24: #{mlp_render_fea_forward.1} parent=11 // pred_fallthru
          _
        // Predicated region
        $region25: #{mlp_render_fea_forward.1} parent=11 // pred_check
          %p218 = pneg %p126
        $region26: #{mlp_render_fea_forward.1} parent=11 // pred_check_branch
          %220 = sbr.rel (%p218) target = $region28
        $region27: #{mlp_render_fea_forward.1} parent=11 // pred_region
          _
        $region28: #{mlp_render_fea_forward.1} parent=11 // pred_fallthru
          _
        // Predicated region
        $region29: #{mlp_render_fea_forward.1} parent=11 // pred_check
          %p221 = pneg %p147
        $region30: #{mlp_render_fea_forward.1} parent=11 // pred_check_branch
          %223 = sbr.rel (%p221) target = $region32
        $region31: #{mlp_render_fea_forward.1} parent=11 // pred_region
          _
        $region32: #{mlp_render_fea_forward.1} parent=11 // pred_fallthru
          _
        // Predicated region
        $region33: #{mlp_render_fea_forward.1} parent=11 // pred_check
          %p224 = pneg %p168
        $region34: #{mlp_render_fea_forward.1} parent=11 // pred_check_branch
          %226 = sbr.rel (%p224) target = $region36
        $region35: #{mlp_render_fea_forward.1} parent=11 // pred_region
          _
        $region36: #{mlp_render_fea_forward.1} parent=11 // pred_fallthru
          _
      $region12: #{mlp_render_fea_forward.1} parent=5 // pred_fallthru
        _
      %p227 = scmp.lt.s32.totalorder %s16, 4
      // Predicated region
      $region37: #{mlp_render_fea_forward.1} parent=5 // pred_check
        %p228 = pneg %p227
      $region38: #{mlp_render_fea_forward.1} parent=5 // pred_check_branch
        %230 = sbr.rel (%p228) target = $region40
      $region39: #{mlp_render_fea_forward.1} parent=5 // pred_region
        // Predicated region
        $region41: #{mlp_render_fea_forward.1} parent=39 // pred_check
          %p231 = pneg %p36
        $region42: #{mlp_render_fea_forward.1} parent=39 // pred_check_branch
          %233 = sbr.rel (%p231) target = $region44
        $region43: #{mlp_render_fea_forward.1} parent=39 // pred_region
          %p234 = scmp.lt.s32.totalorder %s16, 3
          %s235 = scalar_select %p234, %s16, 3
          %s236 = smul.addr %s235, 8
          %s237 = scalar_lea.vmem %s0, %s236
        $region44: #{mlp_render_fea_forward.1} parent=39 // pred_fallthru
          _
      $region40: #{mlp_render_fea_forward.1} parent=5 // pred_fallthru
        _
      %p238 = scmp.le.s32.totalorder 1, %s16
      %p239 = scmp.lt.s32.totalorder %s16, 5
      %p240 = pnand %p238, %p239
      %p241 = pneg %p240
      // Predicated region
      $region45: #{mlp_render_fea_forward.1} parent=5 // pred_check
        _
      $region46: #{mlp_render_fea_forward.1} parent=5 // pred_check_branch
        %243 = sbr.rel (%p240) target = $region48
      $region47: #{mlp_render_fea_forward.1} parent=5 // pred_region
        %s244 = ssub.s32 %s16, 1
        %p245 = scmp.lt.s32.totalorder %s21, 3
        %s246 = scalar_select %p245, %s21, 3
        %s247 = smul.addr %s246, 8
        %s248 = scalar_lea.vmem %s0, %s247
        %p249 = pneg %p42
        %p250 = pneg %p39
        %p251 = pneg %p63
        %p252 = pneg %p60
        %p253 = pneg %p84
        %p254 = pneg %p81
        %p255 = pneg %p105
        %p256 = pneg %p102
        %p257 = pneg %p126
        %p258 = pneg %p123
        %p259 = pneg %p147
        %p260 = pneg %p144
        %p261 = pneg %p168
        %p262 = pneg %p165
        %p263 = pneg %p194
        %p264 = pneg %p191
        %s265 = sand.u32 %s181, 1
        %s266 = scalar_lea.sflag [#allocation3], %s265
        %s267 = sand.u32 %s181, 1
        %s268 = smul.addr %s267, 4
        %s269 = scalar_lea.vmem [#allocation2], %s268
        %p270 = scmp.lt.s32.totalorder %s21, 3
        %s271 = scalar_select %p270, %s21, 3
        %s272 = smul.addr %s271, 8
        %s273 = scalar_lea.vmem %s0, %s272
        %v275 = vld [vmem:[%s273] sm:$0xff]
        %v276 = vand.u32 2147483647, %v275
        %vm277 = vcmp.le.f32.partialorder %v276, 0.7853982
        %vm278 = vcmp.lt.s32.totalorder %v275, 0
        %v279 = vand.u32 %v275, 2139095040
        %v280 = vshrl.u32 %v279, 23
        %v281 = vsub.s32 %v280, 127
        %v282 = vand.u32 2147483647, %v275
        %v283 = vand.u32 %v282, 8388607
        %v284 = vor.u32 %v283, 8388608
        %v285 = vsub.s32 0, %v284
        %v286 = vadd.s32 %v281, 1
        %vm287 = vcmp.gt.s32.totalorder %v286, 0
        %v288 = vsel %vm287, %v286, 0
        %v289 = vshrl.u32 %v288, 5
        %v290 = vand.u32 %v288, 31
        %v291 = vsub.s32 32, %v290
        %v292 = vshrl.u32 683565275, %v291
        %v293 = vshll.u32 683565275, %v290
        %v294 = vshrl.u32 2475754826, %v291
        %v295 = vor.u32 %v293, %v294
        %v296 = vshll.u32 2475754826, %v290
        %v297 = vshrl.u32 2131351028, %v291
        %v298 = vor.u32 %v296, %v297
        %v299 = vshll.u32 2131351028, %v290
        %v300 = vshrl.u32 2102212464, %v291
        %v301 = vor.u32 %v299, %v300
        %v302 = vshll.u32 2102212464, %v290
        %v303 = vshrl.u32 920167782, %v291
        %v304 = vor.u32 %v302, %v303
        %v305 = vshll.u32 920167782, %v290
        %v306 = vshrl.u32 1326507024, %v291
        %v307 = vor.u32 %v305, %v306
        %vm308 = vcmp.lt.s32.totalorder %v289, 1
        %vm309 = vcmp.lt.s32.totalorder %v289, 2
        %vm310 = vcmp.lt.s32.totalorder %v289, 3
        %vm311 = vcmp.lt.s32.totalorder %v289, 4
        %v312 = vsel %vm308, %v292, %v295
        %v313 = vsel %vm311, %v301, 2102212464
        %v314 = vsel %vm310, %v298, %v313
        %v315 = vsel %vm309, %v312, %v314
        %v316 = vsel %vm308, %v295, %v298
        %v317 = vsel %vm311, %v304, 920167782
        %v318 = vsel %vm310, %v301, %v317
        %v319 = vsel %vm309, %v316, %v318
        %v320 = vsel %vm308, %v298, %v301
        %v321 = vsel %vm311, %v307, 1326507024
        %v322 = vsel %vm310, %v304, %v321
        %v323 = vsel %vm309, %v320, %v322
        %v324 = vshll.u32 %v284, 8
        %v325 = vmul.u32.u64.compose %v324, %v323
        %v326 = vextract.low.u32 %v325
        %v327 = vextract.high.u32 %v325
        %v328 = vmul.u32.u64.compose %v324, %v319
        %v329 = vextract.low.u32 %v328
        %v330 = vextract.high.u32 %v328
        %v331 = vmul.u32 %v324, %v315
        %v332 = vadd.s32 %v327, %v329
        %vm333 = vc.u32 %v327, %v329
        %v334 = vadd.s32 %v330, 1
        %v335 = vsel %vm333, %v334, %v330
        %v336 = vadd.s32 %v331, %v335
        %v337 = vadd.s32 %v336, 536870912
        %v338 = vshrl.u32 %v337, 30
        %v339 = vshll.u32 %v338, 30
        %v340 = vsub.s32 %v336, %v339
        %vm341 = vcmp.lt.s32.totalorder %v340, 0
        %v342 = vsub.s32 0, %v340
        %v343 = vsel %vm341, %v342, %v340
        %v344 = vclz %v343
        %v345 = vsub.s32 %v344, 2
        %vm346 = vcmp.gt.s32.totalorder 0, %v345
        %v347 = vsel %vm346, 0, %v345
        %v348 = vsub.s32 32, %v347
        %v349 = vshll.u32 %v340, %v347
        %v350 = vshrl.u32 %v332, %v348
        %v351 = vor.u32 %v349, %v350
        %v352 = vsub.s32 4294967266, %v347
        %v353 = vadd.s32 %v352, 127
        %v354 = vshll.u32 %v353, 23
        %v355 = vor.u32 4788187, %v354
        %v356 = vand.u32 2147483647, %v355
        %v358 = vcvt.s32.f32 %v351
        %v359 = vmul.f32 %v358, %v356
        %v360 = vxor.u32 %v359, 2147483648
        %v361 = vsel %vm278, %v360, %v359
        %v362 = vsub.s32 4, %v338
        %v363 = vsel %vm278, %v362, %v338
        %v364 = vsel %vm277, %v275, %v361
        %v365 = vsel %vm277, 0, %v363
        %v366 = vcosq.f32.pop %v364
        %v367 = vsinq.f32.pop %v364
        %vm368 = vweird.f32 %v275
        %v369 = vadd.s32 %v365, 3
        %v370 = vand.u32 %v369, 3
        %vm371 = vcmp.lt.s32.totalorder %v370, 2
        %vm372 = vcmp.eq.s32.totalorder %v370, 0
        %v373 = vxor.u32 %v367, 2147483648
        %v374 = vsel %vm372, %v366, %v373
        %vm375 = vcmp.eq.s32.totalorder %v370, 2
        %v376 = vxor.u32 %v366, 2147483648
        %v377 = vsel %vm375, %v376, %v367
        %v378 = vsel %vm371, %v374, %v377
        %v379 = vsel %vm368, nan, %v378
        %v380 = vand.u32 2147483647, %v275
        %vm381 = vcmp.le.f32.partialorder %v380, 0.7853982
        %vm382 = vcmp.lt.s32.totalorder %v275, 0
        %v383 = vand.u32 %v275, 2139095040
        %v384 = vshrl.u32 %v383, 23
        %v385 = vsub.s32 %v384, 127
        %v386 = vand.u32 2147483647, %v275
        %v387 = vand.u32 %v386, 8388607
        %v388 = vor.u32 %v387, 8388608
        %v389 = vsub.s32 0, %v388
        %v390 = vadd.s32 %v385, 1
        %vm391 = vcmp.gt.s32.totalorder %v390, 0
        %v392 = vsel %vm391, %v390, 0
        %v393 = vshrl.u32 %v392, 5
        %v394 = vand.u32 %v392, 31
        %v395 = vsub.s32 32, %v394
        %v396 = vshrl.u32 683565275, %v395
        %v397 = vshll.u32 683565275, %v394
        %v398 = vshrl.u32 2475754826, %v395
        %v399 = vor.u32 %v397, %v398
        %v400 = vshll.u32 2475754826, %v394
        %v401 = vshrl.u32 2131351028, %v395
        %v402 = vor.u32 %v400, %v401
        %v403 = vshll.u32 2131351028, %v394
        %v404 = vshrl.u32 2102212464, %v395
        %v405 = vor.u32 %v403, %v404
        %v406 = vshll.u32 2102212464, %v394
        %v407 = vshrl.u32 920167782, %v395
        %v408 = vor.u32 %v406, %v407
        %v409 = vshll.u32 920167782, %v394
        %v410 = vshrl.u32 1326507024, %v395
        %v411 = vor.u32 %v409, %v410
        %vm412 = vcmp.lt.s32.totalorder %v393, 1
        %vm413 = vcmp.lt.s32.totalorder %v393, 2
        %vm414 = vcmp.lt.s32.totalorder %v393, 3
        %vm415 = vcmp.lt.s32.totalorder %v393, 4
        %v416 = vsel %vm412, %v396, %v399
        %v417 = vsel %vm415, %v405, 2102212464
        %v418 = vsel %vm414, %v402, %v417
        %v419 = vsel %vm413, %v416, %v418
        %v420 = vsel %vm412, %v399, %v402
        %v421 = vsel %vm415, %v408, 920167782
        %v422 = vsel %vm414, %v405, %v421
        %v423 = vsel %vm413, %v420, %v422
        %v424 = vsel %vm412, %v402, %v405
        %v425 = vsel %vm415, %v411, 1326507024
        %v426 = vsel %vm414, %v408, %v425
        %v427 = vsel %vm413, %v424, %v426
        %v428 = vshll.u32 %v388, 8
        %v429 = vmul.u32.u64.compose %v428, %v427
        %v430 = vextract.low.u32 %v429
        %v431 = vextract.high.u32 %v429
        %v432 = vmul.u32.u64.compose %v428, %v423
        %v433 = vextract.low.u32 %v432
        %v434 = vextract.high.u32 %v432
        %v435 = vmul.u32 %v428, %v419
        %v436 = vadd.s32 %v431, %v433
        %vm437 = vc.u32 %v431, %v433
        %v438 = vadd.s32 %v434, 1
        %v439 = vsel %vm437, %v438, %v434
        %v440 = vadd.s32 %v435, %v439
        %v441 = vadd.s32 %v440, 536870912
        %v442 = vshrl.u32 %v441, 30
        %v443 = vshll.u32 %v442, 30
        %v444 = vsub.s32 %v440, %v443
        %vm445 = vcmp.lt.s32.totalorder %v444, 0
        %v446 = vsub.s32 0, %v444
        %v447 = vsel %vm445, %v446, %v444
        %v448 = vclz %v447
        %v449 = vsub.s32 %v448, 2
        %vm450 = vcmp.gt.s32.totalorder 0, %v449
        %v451 = vsel %vm450, 0, %v449
        %v452 = vsub.s32 32, %v451
        %v453 = vshll.u32 %v444, %v451
        %v454 = vshrl.u32 %v436, %v452
        %v455 = vor.u32 %v453, %v454
        %v456 = vsub.s32 4294967266, %v451
        %v457 = vadd.s32 %v456, 127
        %v458 = vshll.u32 %v457, 23
        %v459 = vor.u32 4788187, %v458
        %v460 = vand.u32 2147483647, %v459
        %v462 = vcvt.s32.f32 %v455
        %v463 = vmul.f32 %v462, %v460
        %v464 = vxor.u32 %v463, 2147483648
        %v465 = vsel %vm382, %v464, %v463
        %v466 = vsub.s32 4, %v442
        %v467 = vsel %vm382, %v466, %v442
        %v468 = vsel %vm381, %v275, %v465
        %v469 = vsel %vm381, 0, %v467
        %v470 = vcosq.f32.pop %v468
        %v471 = vsinq.f32.pop %v468
        %vm472 = vweird.f32 %v275
        %v473 = vand.u32 %v469, 3
        %vm474 = vcmp.lt.s32.totalorder %v473, 2
        %vm475 = vcmp.eq.s32.totalorder %v473, 0
        %v476 = vxor.u32 %v471, 2147483648
        %v477 = vsel %vm475, %v470, %v476
        %vm478 = vcmp.eq.s32.totalorder %v473, 2
        %v479 = vxor.u32 %v470, 2147483648
        %v480 = vsel %vm478, %v479, %v471
        %v481 = vsel %vm474, %v477, %v480
        %v482 = vsel %vm472, nan, %v481
        %v483 = vmul.f32 %v379, 2.0
        %v484 = vmul.f32 %v483, %v482
        %v485 = vmul.f32 %v483, %v379
        %v486 = vsub.f32 1.0, %v485
        %v487 = vmul.f32 %v484, 2.0
        %v488 = vmul.f32 %v487, %v486
        %v489 = vmul.f32 %v487, %v484
        %v490 = vsub.f32 1.0, %v489
        %v491 = vmul.f32 %v488, 2.0
        %v492 = vmul.f32 %v491, %v490
        %v493 = vmul.f32 %v491, %v488
        %v494 = vsub.f32 1.0, %v493
        %v495 = vmul.f32 %v492, 2.0
        %v496 = vmul.f32 %v495, %v494
        %v497 = vmul.f32 %v495, %v492
        %v498 = vsub.f32 1.0, %v497
        %v499 = vmul.f32 %v496, 2.0
        %v500 = vmul.f32 %v499, %v498
        %v501 = vmul.f32 %v499, %v496
        %v502 = vsub.f32 1.0, %v501
        %v503 = vpack.c.bf16 %v379, %v275
        %v504 = vpack.c.bf16 %v484, %v482
        %v505 = vpack.c.bf16 %v488, %v486
        %v506 = vpack.c.bf16 %v492, %v490
        %v507 = vpack.c.bf16 %v496, %v494
        %v508 = vpack.c.bf16 %v500, %v498
        %v509 = vpack.c.bf16 0.0, %v502
        %v510 = vpack.c.bf16 0.0, 0.0
        %v511 = vld [vmem:[%s1] sm:$0xf]
        %v512 = vld [vmem:[%s1 + $0x4] sm:$0xf]
        %v513 = vld [vmem:[%s1 + $0x8] sm:$0xf]
        %v514 = vld [vmem:[%s1 + $0xc] sm:$0xf]
        %v515 = vld [vmem:[%s1 + $0x10] sm:$0xf]
        %v516 = vld [vmem:[%s1 + $0x14] sm:$0xf]
        %v517 = vld [vmem:[%s1 + $0x18] sm:$0xf]
        %v518 = vld [vmem:[%s1 + $0x1c] sm:$0xf]
        %v519 = vld [vmem:[%s1 + $0x20] sm:$0xf]
        %v520 = vld [vmem:[%s1 + $0x24] sm:$0xf]
        %v521 = vld [vmem:[%s1 + $0x28] sm:$0xf]
        %v522 = vld [vmem:[%s1 + $0x2c] sm:$0xf]
        %v523 = vld [vmem:[%s1 + $0x30] sm:$0xf]
        %v524 = vld [vmem:[%s1 + $0x34] sm:$0xf]
        %v525 = vld [vmem:[%s1 + $0x38] sm:$0xf]
        %v526 = vld [vmem:[%s1 + $0x3c] sm:$0xf]
        %v527 = vld [vmem:[%s2] sm:$0xff]
        %v528 = vld [vmem:[%s2 + $0x8] sm:$0xff]
        %v529 = vld [vmem:[%s2 + $0x10] sm:$0xff]
        %v530 = vld [vmem:[%s2 + $0x18] sm:$0xff]
        %v531 = vld [vmem:[%s2 + $0x20] sm:$0xff]
        %v532 = vld [vmem:[%s2 + $0x28] sm:$0xff]
        %v533 = vld [vmem:[%s2 + $0x30] sm:$0xff]
        %v534 = vld [vmem:[%s2 + $0x38] sm:$0xff]
        %v535 = vld [vmem:[%s2 + $0x40] sm:$0xff]
        %v536 = vld [vmem:[%s2 + $0x48] sm:$0xff]
        %v537 = vld [vmem:[%s2 + $0x50] sm:$0xff]
        %v538 = vld [vmem:[%s2 + $0x58] sm:$0xff]
        %v539 = vld [vmem:[%s2 + $0x60] sm:$0xff]
        %v540 = vld [vmem:[%s2 + $0x68] sm:$0xff]
        %v541 = vld [vmem:[%s2 + $0x70] sm:$0xff]
        %v542 = vld [vmem:[%s2 + $0x78] sm:$0xff]
        %544 = vset.pattern.permute.xlu0 0
        %545 = vperm.xlu0 %544, %v527
        %v546 = vpop.permute.xlu0 %545
        %549 = vset.pattern.permute.xlu0 0
        %550 = vperm.xlu0 %549, %v528
        %v551 = vpop.permute.xlu0 %550
        %554 = vset.pattern.permute.xlu0 0
        %555 = vperm.xlu0 %554, %v529
        %v556 = vpop.permute.xlu0 %555
        %559 = vset.pattern.permute.xlu0 0
        %560 = vperm.xlu0 %559, %v530
        %v561 = vpop.permute.xlu0 %560
        %564 = vset.pattern.permute.xlu0 0
        %565 = vperm.xlu0 %564, %v531
        %v566 = vpop.permute.xlu0 %565
        %569 = vset.pattern.permute.xlu0 0
        %570 = vperm.xlu0 %569, %v532
        %v571 = vpop.permute.xlu0 %570
        %574 = vset.pattern.permute.xlu0 0
        %575 = vperm.xlu0 %574, %v533
        %v576 = vpop.permute.xlu0 %575
        %579 = vset.pattern.permute.xlu0 0
        %580 = vperm.xlu0 %579, %v534
        %v581 = vpop.permute.xlu0 %580
        %584 = vset.pattern.permute.xlu0 0
        %585 = vperm.xlu0 %584, %v535
        %v586 = vpop.permute.xlu0 %585
        %589 = vset.pattern.permute.xlu0 0
        %590 = vperm.xlu0 %589, %v536
        %v591 = vpop.permute.xlu0 %590
        %594 = vset.pattern.permute.xlu0 0
        %595 = vperm.xlu0 %594, %v537
        %v596 = vpop.permute.xlu0 %595
        %599 = vset.pattern.permute.xlu0 0
        %600 = vperm.xlu0 %599, %v538
        %v601 = vpop.permute.xlu0 %600
        %604 = vset.pattern.permute.xlu0 0
        %605 = vperm.xlu0 %604, %v539
        %v606 = vpop.permute.xlu0 %605
        %609 = vset.pattern.permute.xlu0 0
        %610 = vperm.xlu0 %609, %v540
        %v611 = vpop.permute.xlu0 %610
        %614 = vset.pattern.permute.xlu0 0
        %615 = vperm.xlu0 %614, %v541
        %v616 = vpop.permute.xlu0 %615
        %619 = vset.pattern.permute.xlu0 0
        %620 = vperm.xlu0 %619, %v542
        %v621 = vpop.permute.xlu0 %620
        %v639 = vunpack.c.l.b16 %v511
        %v640 = vunpack.c.l.b16 %v512
        %v641 = vunpack.c.l.b16 %v513
        %v642 = vunpack.c.l.b16 %v514
        %v643 = vunpack.c.l.b16 %v515
        %v644 = vunpack.c.l.b16 %v516
        %v645 = vunpack.c.l.b16 %v517
        %v646 = vunpack.c.l.b16 %v518
        %v647 = vunpack.c.l.b16 %v519
        %v648 = vunpack.c.l.b16 %v520
        %v649 = vunpack.c.l.b16 %v521
        %v650 = vunpack.c.l.b16 %v522
        %v651 = vunpack.c.l.b16 %v523
        %v652 = vunpack.c.l.b16 %v524
        %v653 = vunpack.c.l.b16 %v525
        %v654 = vunpack.c.l.b16 %v526
        %v655 = vpack.c.b16 %v640, %v639
        %v656 = vpack.c.b16 %v642, %v641
        %v657 = vpack.c.b16 %v644, %v643
        %v658 = vpack.c.b16 %v646, %v645
        %v659 = vpack.c.b16 %v648, %v647
        %v660 = vpack.c.b16 %v650, %v649
        %v661 = vpack.c.b16 %v652, %v651
        %v662 = vpack.c.b16 %v654, %v653
        %671 = vmatprep.subr.bf16.mxu0 0
        %672 = vmatpush1.bf16.msra.mxu0 %v510
        %673 = vmatprep.subr.bf16.mxu0 0
        %674 = vmatpush1.bf16.msra.mxu0 %v509
        %675 = vmatprep.subr.bf16.mxu0 0
        %676 = vmatpush1.bf16.msra.mxu0 %v508
        %677 = vmatprep.subr.bf16.mxu0 0
        %678 = vmatpush1.bf16.msra.mxu0 %v507
        %679 = vmatprep.subr.bf16.mxu0 0
        %680 = vmatpush1.bf16.msra.mxu0 %v506
        %681 = vmatprep.subr.bf16.mxu0 0
        %682 = vmatpush1.bf16.msra.mxu0 %v505
        %683 = vmatprep.subr.bf16.mxu0 0
        %684 = vmatpush1.bf16.msra.mxu0 %v504
        %685 = vmatprep.subr.bf16.mxu0 0
        %686 = vmatpush1.bf16.msra.mxu0 %v503
        %687 = vmatprep.subr.bf16.mxu0 0
        %688 = vmatpush2.bf16.msra.mxu0 0
        %689 = vmatprep.subr.bf16.mxu0 0
        %690 = vmatpush2.bf16.msra.mxu0 0
        %691 = vmatprep.subr.bf16.mxu0 0
        %692 = vmatpush2.bf16.msra.mxu0 0
        %693 = vmatprep.subr.bf16.mxu0 0
        %694 = vmatpush2.bf16.msra.mxu0 0
        %695 = vmatprep.subr.bf16.mxu0 0
        %696 = vmatpush2.bf16.msra.mxu0 0
        %697 = vmatprep.subr.bf16.mxu0 0
        %698 = vmatpush2.bf16.msra.mxu0 0
        %699 = vmatprep.subr.bf16.mxu0 0
        %700 = vmatpush2.bf16.msra.mxu0 0
        %701 = vmatprep.subr.bf16.mxu0 0
        %702 = vmatpush2.bf16.msra.mxu0 0
        %703 = vmatprep.mubr.bf16.mxu0 0
        %704 = vmatmul.mubr.bf16.gmra.mxu0 %v655
        %v705 = vpop.f32.mrf.mxu0
        %v706 = vadd.f32 %v546, %v705
        %v707 = vpop.f32.mrf.mxu0
        %v708 = vpop.f32.mrf.mxu0
        %v709 = vadd.f32 %v551, %v708
        %v710 = vpop.f32.mrf.mxu0
        %711 = vmatprep.mubr.bf16.mxu0 0
        %712 = vmatmul.mubr.bf16.gmra.mxu0 %v656
        %v713 = vpop.f32.mrf.mxu0
        %v714 = vadd.f32 %v556, %v713
        %v715 = vpop.f32.mrf.mxu0
        %v716 = vpop.f32.mrf.mxu0
        %v717 = vadd.f32 %v561, %v716
        %v718 = vpop.f32.mrf.mxu0
        %719 = vmatprep.mubr.bf16.mxu0 0
        %720 = vmatmul.mubr.bf16.gmra.mxu0 %v657
        %v721 = vpop.f32.mrf.mxu0
        %v722 = vadd.f32 %v566, %v721
        %v723 = vpop.f32.mrf.mxu0
        %v724 = vpop.f32.mrf.mxu0
        %v725 = vadd.f32 %v571, %v724
        %v726 = vpop.f32.mrf.mxu0
        %727 = vmatprep.mubr.bf16.mxu0 0
        %728 = vmatmul.mubr.bf16.gmra.mxu0 %v658
        %v729 = vpop.f32.mrf.mxu0
        %v730 = vadd.f32 %v576, %v729
        %v731 = vpop.f32.mrf.mxu0
        %v732 = vpop.f32.mrf.mxu0
        %v733 = vadd.f32 %v581, %v732
        %v734 = vpop.f32.mrf.mxu0
        %735 = vmatprep.mubr.bf16.mxu0 0
        %736 = vmatmul.mubr.bf16.gmra.mxu0 %v659
        %v737 = vpop.f32.mrf.mxu0
        %v738 = vadd.f32 %v586, %v737
        %v739 = vpop.f32.mrf.mxu0
        %v740 = vpop.f32.mrf.mxu0
        %v741 = vadd.f32 %v591, %v740
        %v742 = vpop.f32.mrf.mxu0
        %743 = vmatprep.mubr.bf16.mxu0 0
        %744 = vmatmul.mubr.bf16.gmra.mxu0 %v660
        %v745 = vpop.f32.mrf.mxu0
        %v746 = vadd.f32 %v596, %v745
        %v747 = vpop.f32.mrf.mxu0
        %v748 = vpop.f32.mrf.mxu0
        %v749 = vadd.f32 %v601, %v748
        %v750 = vpop.f32.mrf.mxu0
        %751 = vmatprep.mubr.bf16.mxu0 0
        %752 = vmatmul.mubr.bf16.gmra.mxu0 %v661
        %v753 = vpop.f32.mrf.mxu0
        %v754 = vadd.f32 %v606, %v753
        %v755 = vpop.f32.mrf.mxu0
        %v756 = vpop.f32.mrf.mxu0
        %v757 = vadd.f32 %v611, %v756
        %v758 = vpop.f32.mrf.mxu0
        %759 = vmatprep.mubr.bf16.mxu0 0
        %760 = vmatmul.mubr.bf16.gmra.mxu0 %v662
        %v761 = vpop.f32.mrf.mxu0
        %v762 = vadd.f32 %v616, %v761
        %v763 = vpop.f32.mrf.mxu0
        %v764 = vpop.f32.mrf.mxu0
        %v765 = vadd.f32 %v621, %v764
        %v766 = vpop.f32.mrf.mxu0
        %767 = vdwg.mxu0
        %v768 = vmax.f32 %v706, 0.0
        %v769 = vmax.f32 %v709, 0.0
        %v770 = vmax.f32 %v714, 0.0
        %v771 = vmax.f32 %v717, 0.0
        %v772 = vmax.f32 %v722, 0.0
        %v773 = vmax.f32 %v725, 0.0
        %v774 = vmax.f32 %v730, 0.0
        %v775 = vmax.f32 %v733, 0.0
        %v776 = vmax.f32 %v738, 0.0
        %v777 = vmax.f32 %v741, 0.0
        %v778 = vmax.f32 %v746, 0.0
        %v779 = vmax.f32 %v749, 0.0
        %v780 = vmax.f32 %v754, 0.0
        %v781 = vmax.f32 %v757, 0.0
        %v782 = vmax.f32 %v762, 0.0
        %v783 = vmax.f32 %v765, 0.0
        %v784 = vpack.c.bf16 %v769, %v768
        %v785 = vpack.c.bf16 %v771, %v770
        %v786 = vpack.c.bf16 %v773, %v772
        %v787 = vpack.c.bf16 %v775, %v774
        %v788 = vpack.c.bf16 %v777, %v776
        %v789 = vpack.c.bf16 %v779, %v778
        %v790 = vpack.c.bf16 %v781, %v780
        %v791 = vpack.c.bf16 %v783, %v782
        %v792 = vld [vmem:[%s3] sm:$0xf]
        %v793 = vld [vmem:[%s3 + $0x4] sm:$0xf]
        %v794 = vld [vmem:[%s3 + $0x8] sm:$0xf]
        %v795 = vld [vmem:[%s3 + $0xc] sm:$0xf]
        %v796 = vld [vmem:[%s3 + $0x10] sm:$0xf]
        %v797 = vld [vmem:[%s3 + $0x14] sm:$0xf]
        %v798 = vld [vmem:[%s3 + $0x18] sm:$0xf]
        %v799 = vld [vmem:[%s3 + $0x1c] sm:$0xf]
        %v800 = vld [vmem:[%s3 + $0x20] sm:$0xf]
        %v801 = vld [vmem:[%s3 + $0x24] sm:$0xf]
        %v802 = vld [vmem:[%s3 + $0x28] sm:$0xf]
        %v803 = vld [vmem:[%s3 + $0x2c] sm:$0xf]
        %v804 = vld [vmem:[%s3 + $0x30] sm:$0xf]
        %v805 = vld [vmem:[%s3 + $0x34] sm:$0xf]
        %v806 = vld [vmem:[%s3 + $0x38] sm:$0xf]
        %v807 = vld [vmem:[%s3 + $0x3c] sm:$0xf]
        %v808 = vld [vmem:[%s4] sm:$0xff]
        %v809 = vld [vmem:[%s4 + $0x8] sm:$0xff]
        %v810 = vld [vmem:[%s4 + $0x10] sm:$0xff]
        %v811 = vld [vmem:[%s4 + $0x18] sm:$0xff]
        %v812 = vld [vmem:[%s4 + $0x20] sm:$0xff]
        %v813 = vld [vmem:[%s4 + $0x28] sm:$0xff]
        %v814 = vld [vmem:[%s4 + $0x30] sm:$0xff]
        %v815 = vld [vmem:[%s4 + $0x38] sm:$0xff]
        %v816 = vld [vmem:[%s4 + $0x40] sm:$0xff]
        %v817 = vld [vmem:[%s4 + $0x48] sm:$0xff]
        %v818 = vld [vmem:[%s4 + $0x50] sm:$0xff]
        %v819 = vld [vmem:[%s4 + $0x58] sm:$0xff]
        %v820 = vld [vmem:[%s4 + $0x60] sm:$0xff]
        %v821 = vld [vmem:[%s4 + $0x68] sm:$0xff]
        %v822 = vld [vmem:[%s4 + $0x70] sm:$0xff]
        %v823 = vld [vmem:[%s4 + $0x78] sm:$0xff]
        %825 = vset.pattern.permute.xlu0 0
        %826 = vperm.xlu0 %825, %v808
        %v827 = vpop.permute.xlu0 %826
        %830 = vset.pattern.permute.xlu0 0
        %831 = vperm.xlu0 %830, %v809
        %v832 = vpop.permute.xlu0 %831
        %835 = vset.pattern.permute.xlu0 0
        %836 = vperm.xlu0 %835, %v810
        %v837 = vpop.permute.xlu0 %836
        %840 = vset.pattern.permute.xlu0 0
        %841 = vperm.xlu0 %840, %v811
        %v842 = vpop.permute.xlu0 %841
        %845 = vset.pattern.permute.xlu0 0
        %846 = vperm.xlu0 %845, %v812
        %v847 = vpop.permute.xlu0 %846
        %850 = vset.pattern.permute.xlu0 0
        %851 = vperm.xlu0 %850, %v813
        %v852 = vpop.permute.xlu0 %851
        %855 = vset.pattern.permute.xlu0 0
        %856 = vperm.xlu0 %855, %v814
        %v857 = vpop.permute.xlu0 %856
        %860 = vset.pattern.permute.xlu0 0
        %861 = vperm.xlu0 %860, %v815
        %v862 = vpop.permute.xlu0 %861
        %865 = vset.pattern.permute.xlu0 0
        %866 = vperm.xlu0 %865, %v816
        %v867 = vpop.permute.xlu0 %866
        %870 = vset.pattern.permute.xlu0 0
        %871 = vperm.xlu0 %870, %v817
        %v872 = vpop.permute.xlu0 %871
        %875 = vset.pattern.permute.xlu0 0
        %876 = vperm.xlu0 %875, %v818
        %v877 = vpop.permute.xlu0 %876
        %880 = vset.pattern.permute.xlu0 0
        %881 = vperm.xlu0 %880, %v819
        %v882 = vpop.permute.xlu0 %881
        %885 = vset.pattern.permute.xlu0 0
        %886 = vperm.xlu0 %885, %v820
        %v887 = vpop.permute.xlu0 %886
        %890 = vset.pattern.permute.xlu0 0
        %891 = vperm.xlu0 %890, %v821
        %v892 = vpop.permute.xlu0 %891
        %895 = vset.pattern.permute.xlu0 0
        %896 = vperm.xlu0 %895, %v822
        %v897 = vpop.permute.xlu0 %896
        %900 = vset.pattern.permute.xlu0 0
        %901 = vperm.xlu0 %900, %v823
        %v902 = vpop.permute.xlu0 %901
        %v920 = vunpack.c.l.b16 %v792
        %v921 = vunpack.c.l.b16 %v793
        %v922 = vunpack.c.l.b16 %v794
        %v923 = vunpack.c.l.b16 %v795
        %v924 = vunpack.c.l.b16 %v796
        %v925 = vunpack.c.l.b16 %v797
        %v926 = vunpack.c.l.b16 %v798
        %v927 = vunpack.c.l.b16 %v799
        %v928 = vunpack.c.l.b16 %v800
        %v929 = vunpack.c.l.b16 %v801
        %v930 = vunpack.c.l.b16 %v802
        %v931 = vunpack.c.l.b16 %v803
        %v932 = vunpack.c.l.b16 %v804
        %v933 = vunpack.c.l.b16 %v805
        %v934 = vunpack.c.l.b16 %v806
        %v935 = vunpack.c.l.b16 %v807
        %v936 = vpack.c.b16 %v921, %v920
        %v937 = vpack.c.b16 %v923, %v922
        %v938 = vpack.c.b16 %v925, %v924
        %v939 = vpack.c.b16 %v927, %v926
        %v940 = vpack.c.b16 %v929, %v928
        %v941 = vpack.c.b16 %v931, %v930
        %v942 = vpack.c.b16 %v933, %v932
        %v943 = vpack.c.b16 %v935, %v934
        %952 = vmatprep.subr.bf16.mxu0 0
        %953 = vmatpush1.bf16.msra.mxu0 %v791
        %954 = vmatprep.subr.bf16.mxu0 0
        %955 = vmatpush1.bf16.msra.mxu0 %v790
        %956 = vmatprep.subr.bf16.mxu0 0
        %957 = vmatpush1.bf16.msra.mxu0 %v789
        %958 = vmatprep.subr.bf16.mxu0 0
        %959 = vmatpush1.bf16.msra.mxu0 %v788
        %960 = vmatprep.subr.bf16.mxu0 0
        %961 = vmatpush1.bf16.msra.mxu0 %v787
        %962 = vmatprep.subr.bf16.mxu0 0
        %963 = vmatpush1.bf16.msra.mxu0 %v786
        %964 = vmatprep.subr.bf16.mxu0 0
        %965 = vmatpush1.bf16.msra.mxu0 %v785
        %966 = vmatprep.subr.bf16.mxu0 0
        %967 = vmatpush1.bf16.msra.mxu0 %v784
        %968 = vmatprep.subr.bf16.mxu0 0
        %969 = vmatpush2.bf16.msra.mxu0 0
        %970 = vmatprep.subr.bf16.mxu0 0
        %971 = vmatpush2.bf16.msra.mxu0 0
        %972 = vmatprep.subr.bf16.mxu0 0
        %973 = vmatpush2.bf16.msra.mxu0 0
        %974 = vmatprep.subr.bf16.mxu0 0
        %975 = vmatpush2.bf16.msra.mxu0 0
        %976 = vmatprep.subr.bf16.mxu0 0
        %977 = vmatpush2.bf16.msra.mxu0 0
        %978 = vmatprep.subr.bf16.mxu0 0
        %979 = vmatpush2.bf16.msra.mxu0 0
        %980 = vmatprep.subr.bf16.mxu0 0
        %981 = vmatpush2.bf16.msra.mxu0 0
        %982 = vmatprep.subr.bf16.mxu0 0
        %983 = vmatpush2.bf16.msra.mxu0 0
        %984 = vmatprep.mubr.bf16.mxu0 0
        %985 = vmatmul.mubr.bf16.gmra.mxu0 %v936
        %v986 = vpop.f32.mrf.mxu0
        %v987 = vadd.f32 %v827, %v986
        %v988 = vpop.f32.mrf.mxu0
        %v989 = vpop.f32.mrf.mxu0
        %v990 = vadd.f32 %v832, %v989
        %v991 = vpop.f32.mrf.mxu0
        %992 = vmatprep.mubr.bf16.mxu0 0
        %993 = vmatmul.mubr.bf16.gmra.mxu0 %v937
        %v994 = vpop.f32.mrf.mxu0
        %v995 = vadd.f32 %v837, %v994
        %v996 = vpop.f32.mrf.mxu0
        %v997 = vpop.f32.mrf.mxu0
        %v998 = vadd.f32 %v842, %v997
        %v999 = vpop.f32.mrf.mxu0
        %1000 = vmatprep.mubr.bf16.mxu0 0
        %1001 = vmatmul.mubr.bf16.gmra.mxu0 %v938
        %v1002 = vpop.f32.mrf.mxu0
        %v1003 = vadd.f32 %v847, %v1002
        %v1004 = vpop.f32.mrf.mxu0
        %v1005 = vpop.f32.mrf.mxu0
        %v1006 = vadd.f32 %v852, %v1005
        %v1007 = vpop.f32.mrf.mxu0
        %1008 = vmatprep.mubr.bf16.mxu0 0
        %1009 = vmatmul.mubr.bf16.gmra.mxu0 %v939
        %v1010 = vpop.f32.mrf.mxu0
        %v1011 = vadd.f32 %v857, %v1010
        %v1012 = vpop.f32.mrf.mxu0
        %v1013 = vpop.f32.mrf.mxu0
        %v1014 = vadd.f32 %v862, %v1013
        %v1015 = vpop.f32.mrf.mxu0
        %1016 = vmatprep.mubr.bf16.mxu0 0
        %1017 = vmatmul.mubr.bf16.gmra.mxu0 %v940
        %v1018 = vpop.f32.mrf.mxu0
        %v1019 = vadd.f32 %v867, %v1018
        %v1020 = vpop.f32.mrf.mxu0
        %v1021 = vpop.f32.mrf.mxu0
        %v1022 = vadd.f32 %v872, %v1021
        %v1023 = vpop.f32.mrf.mxu0
        %1024 = vmatprep.mubr.bf16.mxu0 0
        %1025 = vmatmul.mubr.bf16.gmra.mxu0 %v941
        %v1026 = vpop.f32.mrf.mxu0
        %v1027 = vadd.f32 %v877, %v1026
        %v1028 = vpop.f32.mrf.mxu0
        %v1029 = vpop.f32.mrf.mxu0
        %v1030 = vadd.f32 %v882, %v1029
        %v1031 = vpop.f32.mrf.mxu0
        %1032 = vmatprep.mubr.bf16.mxu0 0
        %1033 = vmatmul.mubr.bf16.gmra.mxu0 %v942
        %v1034 = vpop.f32.mrf.mxu0
        %v1035 = vadd.f32 %v887, %v1034
        %v1036 = vpop.f32.mrf.mxu0
        %v1037 = vpop.f32.mrf.mxu0
        %v1038 = vadd.f32 %v892, %v1037
        %v1039 = vpop.f32.mrf.mxu0
        %1040 = vmatprep.mubr.bf16.mxu0 0
        %1041 = vmatmul.mubr.bf16.gmra.mxu0 %v943
        %v1042 = vpop.f32.mrf.mxu0
        %v1043 = vadd.f32 %v897, %v1042
        %v1044 = vpop.f32.mrf.mxu0
        %v1045 = vpop.f32.mrf.mxu0
        %v1046 = vadd.f32 %v902, %v1045
        %v1047 = vpop.f32.mrf.mxu0
        %1048 = vdwg.mxu0
        %v1049 = vmax.f32 %v987, 0.0
        %v1050 = vmax.f32 %v990, 0.0
        %v1051 = vmax.f32 %v995, 0.0
        %v1052 = vmax.f32 %v998, 0.0
        %v1053 = vmax.f32 %v1003, 0.0
        %v1054 = vmax.f32 %v1006, 0.0
        %v1055 = vmax.f32 %v1011, 0.0
        %v1056 = vmax.f32 %v1014, 0.0
        %v1057 = vmax.f32 %v1019, 0.0
        %v1058 = vmax.f32 %v1022, 0.0
        %v1059 = vmax.f32 %v1027, 0.0
        %v1060 = vmax.f32 %v1030, 0.0
        %v1061 = vmax.f32 %v1035, 0.0
        %v1062 = vmax.f32 %v1038, 0.0
        %v1063 = vmax.f32 %v1043, 0.0
        %v1064 = vmax.f32 %v1046, 0.0
        %v1065 = vpack.c.bf16 %v1050, %v1049
        %v1066 = vpack.c.bf16 %v1052, %v1051
        %v1067 = vpack.c.bf16 %v1054, %v1053
        %v1068 = vpack.c.bf16 %v1056, %v1055
        %v1069 = vpack.c.bf16 %v1058, %v1057
        %v1070 = vpack.c.bf16 %v1060, %v1059
        %v1071 = vpack.c.bf16 %v1062, %v1061
        %v1072 = vpack.c.bf16 %v1064, %v1063
        %v1073 = vld [vmem:[%s5] sm:$0xf]
        %1074 = vmatprep.subr.bf16.mxu0 0
        %1075 = vmatpush1.bf16.msra.mxu0 %v1072
        %1076 = vmatprep.subr.bf16.mxu0 0
        %1077 = vmatpush1.bf16.msra.mxu0 %v1071
        %1078 = vmatprep.subr.bf16.mxu0 0
        %1079 = vmatpush1.bf16.msra.mxu0 %v1070
        %1080 = vmatprep.subr.bf16.mxu0 0
        %1081 = vmatpush1.bf16.msra.mxu0 %v1069
        %1082 = vmatprep.subr.bf16.mxu0 0
        %1083 = vmatpush1.bf16.msra.mxu0 %v1068
        %1084 = vmatprep.subr.bf16.mxu0 0
        %1085 = vmatpush1.bf16.msra.mxu0 %v1067
        %1086 = vmatprep.subr.bf16.mxu0 0
        %1087 = vmatpush1.bf16.msra.mxu0 %v1066
        %1088 = vmatprep.subr.bf16.mxu0 0
        %1089 = vmatpush1.bf16.msra.mxu0 %v1065
        %1090 = vmatprep.subr.bf16.mxu0 0
        %1091 = vmatpush2.bf16.msra.mxu0 0
        %1092 = vmatprep.subr.bf16.mxu0 0
        %1093 = vmatpush2.bf16.msra.mxu0 0
        %1094 = vmatprep.subr.bf16.mxu0 0
        %1095 = vmatpush2.bf16.msra.mxu0 0
        %1096 = vmatprep.subr.bf16.mxu0 0
        %1097 = vmatpush2.bf16.msra.mxu0 0
        %1098 = vmatprep.subr.bf16.mxu0 0
        %1099 = vmatpush2.bf16.msra.mxu0 0
        %1100 = vmatprep.subr.bf16.mxu0 0
        %1101 = vmatpush2.bf16.msra.mxu0 0
        %1102 = vmatprep.subr.bf16.mxu0 0
        %1103 = vmatpush2.bf16.msra.mxu0 0
        %1104 = vmatprep.subr.bf16.mxu0 0
        %1105 = vmatpush2.bf16.msra.mxu0 0
        %1106 = vmatprep.mubr.bf16.mxu0 0
        %1107 = vmatmul.mubr.bf16.gmra.mxu0 %v1073
        %v1108 = vpop.f32.mrf.mxu0
        %v1109 = vadd.f32 0.0, %v1108
        %v1110 = vpop.f32.mrf.mxu0
        %v1111 = vpop.f32.mrf.mxu0
        %v1112 = vpop.f32.mrf.mxu0
        %1113 = vdwg.mxu0
        %v1114 = vld [vmem:[%s6] sm:$0x7]
        %1116 = vset.pattern.permute.xlu0 0
        %1117 = vperm.xlu0 %1116, %v1114
        %v1118 = vpop.permute.xlu0 %1117
        %v1120 = vadd.f32 %v1109, %v1118
        %v1121 = vsub.f32 0.0, %v1120
        %v1122 = vmul.f32 %v1121, 1.442695
        %v1123 = vpow.pop %v1122
        %v1124 = vadd.f32 %v1123, 1.0
        %v1125 = vrcp.pop %v1124
        %v1126 = vmul.f32 1.0, %v1125
        %1127 = vst [vmem:[%s269] sm:$0x7] %v1126
        %s1128 = sand.u32 %s181, 1
        %s1129 = scalar_lea.sflag [#allocation3], %s1128
        %s1130 = sand.u32 %s181, 1
        %s1131 = smul.addr %s1130, 4
        %s1132 = scalar_lea.vmem [#allocation2], %s1131
        // Predicated region
        $region49: #{mlp_render_fea_forward.1} parent=47 // pred_check
          %p1133 = pneg %p191
        $region50: #{mlp_render_fea_forward.1} parent=47 // pred_check_branch
          %1135 = sbr.rel (%p1133) target = $region52
        $region51: #{mlp_render_fea_forward.1} parent=47 // pred_region
          %s1137 = ssub.s32 64, 64
          %1138 = vsyncadd %s1129, %s1137
          %s1139 = smul.addr %s21, 64
          %s1140 = scalar_lea.hbm %s7, %s1139
          %s1142 = sshll.u32 %s1132, 4
          %s1143 = int_to_ptr.vmem [resolvable:$true] %s1142
          %1145 = dma.vmem_to_hbm [thread:$0]  %s1143, 64, %s1140, %s1129
        $region52: #{mlp_render_fea_forward.1} parent=47 // pred_fallthru
          _
      $region48: #{mlp_render_fea_forward.1} parent=5 // pred_fallthru
        _
      %p1146 = scmp.le.s32.totalorder 2, %s16
      // Predicated region
      $region53: #{mlp_render_fea_forward.1} parent=5 // pred_check
        %p1147 = pneg %p1146
      $region54: #{mlp_render_fea_forward.1} parent=5 // pred_check_branch
        %1149 = sbr.rel (%p1147) target = $region56
      $region55: #{mlp_render_fea_forward.1} parent=5 // pred_region
        %s1150 = ssub.s32 %s16, 2
        // Predicated region
        $region57: #{mlp_render_fea_forward.1} parent=55 // pred_check
          %p1151 = pneg %p197
        $region58: #{mlp_render_fea_forward.1} parent=55 // pred_check_branch
          %1153 = sbr.rel (%p1151) target = $region60
        $region59: #{mlp_render_fea_forward.1} parent=55 // pred_region
          %s1154 = sand.u32 %s182, 1
          %s1155 = scalar_lea.sflag [#allocation3], %s1154
          %s1156 = sand.u32 %s182, 1
          %s1157 = smul.addr %s1156, 4
          %s1158 = scalar_lea.vmem [#allocation2], %s1157
          %1159 = dma.done %s1155, 64
        $region60: #{mlp_render_fea_forward.1} parent=55 // pred_fallthru
          _
      $region56: #{mlp_render_fea_forward.1} parent=5 // pred_fallthru
        _
    $region6: #{mlp_render_fea_forward.1} parent=1 // loop_footer
      %s20 = sadd.s32 1, %s16
    $region7: #{mlp_render_fea_forward.1} parent=1 // loop_footer_branch
      %15 = sbr.rel target = $region3
    $region8: #{mlp_render_fea_forward.1} parent=1 // loop_exit
      _
    %1160 = vsyncpa [#allocation3], 1
    %s1161 = scalar_lea.sflag [#allocation3], 1
    %1162 = vsyncpa %s1161, 1

</llo_original>
